<compile_context>
chip_gen: v7x
topology: tpu7x:2x2x1
jax: 0.10.0
libtpu: 0.0.40
codegen_flags: <defaults>
</compile_context>

<pallas_src>
import jax
import jax.numpy as jnp
from jax.experimental import pallas as pl
from jax.experimental.pallas import tpu as pltpu

_LANE = 128      # lane width; also the padded output-column count
_SUBLANE = 8


def _round_up(n, m):
    return ((n + m - 1) // m) * m


def _pick_tile(batch, requested):
    """Tile rows: multiple of 8, <= requested, and leave >=2 grid steps when
    the batch is big enough (so both TensorCores get work on v7x)."""
    if batch >= 2 * _SUBLANE:
        half = _round_up(batch, 2 * _SUBLANE) // 2        # ~B/2, multiple of 8
        tile = min(requested, half)
    else:
        tile = min(requested, _round_up(batch, _SUBLANE))
    return max(_SUBLANE, _round_up(tile, _SUBLANE))


def mlp_kernel(x_ref, w1_ref, b1_ref, w2_ref, b2_ref, w3_ref, b3_ref,
               w4_ref, b4_ref, o_ref):
    """Fused 4-layer MLP: bf16 MXU matmuls, f32 accumulation, f32 bias/ReLU.
    Dropout is identity (eval mode)."""
    x = x_ref[...]                                                  # bf16 [tm, in]
    h = jnp.dot(x, w1_ref[...], preferred_element_type=jnp.float32) + b1_ref[...]
    h = jnp.maximum(h, 0.0).astype(jnp.bfloat16)
    h = jnp.dot(h, w2_ref[...], preferred_element_type=jnp.float32) + b2_ref[...]
    h = jnp.maximum(h, 0.0).astype(jnp.bfloat16)
    h = jnp.dot(h, w3_ref[...], preferred_element_type=jnp.float32) + b3_ref[...]
    h = jnp.maximum(h, 0.0).astype(jnp.bfloat16)
    # Final layer is padded to 128 output lanes -> unmasked lane-dense stores.
    o_ref[...] = (jnp.dot(h, w4_ref[...], preferred_element_type=jnp.float32)
                  + b4_ref[...])


def advanced_delivery_time_model(x, params, *, tile_batch=512):
    """x: [B, input_dim] float32. params: dict of [in, out] weights + (1, out) biases.
    Returns [B, 1] float32."""
    B, input_dim = x.shape
    H = params["w1"].shape[1]
    H2 = params["w3"].shape[1]

    tile = _pick_tile(B, tile_batch)
    Bp = _round_up(B, tile)
    grid = (Bp // tile,)

    # bf16 inputs/weights for the MXU; biases stay f32 (added post-accumulation).
    xb = x.astype(jnp.bfloat16)
    if Bp != B:
        xb = jnp.pad(xb, ((0, Bp - B), (0, 0)))
    w1 = params["w1"].astype(jnp.bfloat16)
    w2 = params["w2"].astype(jnp.bfloat16)
    w3 = params["w3"].astype(jnp.bfloat16)
    b1 = params["b1"].astype(jnp.float32)
    b2 = params["b2"].astype(jnp.float32)
    b3 = params["b3"].astype(jnp.float32)
    # Pad the 1-column output layer to 128 lanes (zeros beyond column 0).
    w4 = jnp.pad(params["w4"].astype(jnp.bfloat16), ((0, 0), (0, _LANE - 1)))
    b4 = jnp.pad(params["b4"].astype(jnp.float32), ((0, 0), (0, _LANE - 1)))

    def const(shape):
        # Constant index_map: block stays resident in VMEM across all steps.
        return pl.BlockSpec(shape, lambda i: tuple(0 for _ in shape))

    out = pl.pallas_call(
        mlp_kernel,
        out_shape=jax.ShapeDtypeStruct((Bp, _LANE), jnp.float32),
        grid_spec=pltpu.PrefetchScalarGridSpec(
            num_scalar_prefetch=0,
            grid=grid,
            in_specs=[
                pl.BlockSpec((tile, input_dim), lambda i: (i, 0)),   # x tile
                const((input_dim, H)), const((1, H)),                # layer 1
                const((H, H)),         const((1, H)),                # layer 2
                const((H, H2)),        const((1, H2)),               # layer 3
                const((H2, _LANE)),    const((1, _LANE)),            # layer 4 (padded)
            ],
            out_specs=pl.BlockSpec((tile, _LANE), lambda i: (i, 0)),
        ),
        compiler_params=pltpu.CompilerParams(
            dimension_semantics=("parallel",)),
    )(xb, w1, b1, w2, b2, w3, b3, w4, b4)

    return out[:B, :1]


def init_params(key, input_dim, hidden_dim=128):
    """Deterministic synthetic init. Weights stored as [in, out] (pre-transposed)."""
    H, H2 = hidden_dim, hidden_dim // 2
    ks = jax.random.split(key, 8)

    def lin(kw, kb, fan_in, fan_out):
        bound = 1.0 / jnp.sqrt(fan_in)
        w = jax.random.uniform(kw, (fan_in, fan_out), jnp.float32, -bound, bound)
        b = jax.random.uniform(kb, (1, fan_out), jnp.float32, -bound, bound)
        return w, b

    w1, b1 = lin(ks[0], ks[1], input_dim, H)
    w2, b2 = lin(ks[2], ks[3], H, H)
    w3, b3 = lin(ks[4], ks[5], H, H2)
    w4, b4 = lin(ks[6], ks[7], H2, 1)
    return dict(w1=w1, b1=b1, w2=w2, b2=b2, w3=w3, b3=b3, w4=w4, b4=b4)


def reference_forward(x, p):
    h = jnp.maximum(x @ p["w1"] + p["b1"], 0.0)
    h = jnp.maximum(h @ p["w2"] + p["b2"], 0.0)
    h = jnp.maximum(h @ p["w3"] + p["b3"], 0.0)
    return h @ p["w4"] + p["b4"]


if __name__ == "__main__":
    key = jax.random.PRNGKey(0)
    k_param, k_x = jax.random.split(key)

    # Small demo shapes; batch deliberately NOT a multiple of the tile to
    # exercise the pad/slice path and yield >=2 grid steps.
    batch, input_dim, hidden_dim = 200, 32, 128
    params = init_params(k_param, input_dim, hidden_dim)
    x = jax.random.normal(k_x, (batch, input_dim), jnp.float32)

    out = advanced_delivery_time_model(x, params, tile_batch=512)
    out = jax.block_until_ready(out)

    ref = reference_forward(x, params)
    assert out.shape == (batch, 1), out.shape
    # bf16 matmul inputs (f32 accumulation) -> loosened tolerance vs f32 ref.
    assert jnp.allclose(out, ref, atol=3e-2, rtol=3e-2), float(
        jnp.max(jnp.abs(out - ref)))

    print("KERNEL_OK")
</pallas_src>

<mosaic_0001>
module attributes {stable_mosaic.version = 11 : i64} {
  func.func @mlp_kernel(%arg0: i32, %arg1: memref<104x32xbf16, #tpu.memory_space<vmem>>, %arg2: memref<32x128xbf16, #tpu.memory_space<vmem>>, %arg3: memref<1x128xf32, #tpu.memory_space<vmem>>, %arg4: memref<128x128xbf16, #tpu.memory_space<vmem>>, %arg5: memref<1x128xf32, #tpu.memory_space<vmem>>, %arg6: memref<128x64xbf16, #tpu.memory_space<vmem>>, %arg7: memref<1x64xf32, #tpu.memory_space<vmem>>, %arg8: memref<64x128xbf16, #tpu.memory_space<vmem>>, %arg9: memref<1x128xf32, #tpu.memory_space<vmem>>, %arg10: memref<104x128xf32, #tpu.memory_space<vmem>>) attributes {dimension_semantics = [#tpu.dimension_semantics<parallel>], iteration_bounds = array<i64: 2>, scalar_prefetch = 0 : i64, scratch_operands = 0 : i64, tpu.core_type = #tpu.core_type<tc>, window_params = [{transform_indices = @transform_0, window_bounds = array<i64: 104, 32>}, {pipeline_mode = #tpu.pipeline_mode<synchronous>, transform_indices = @transform_1, window_bounds = array<i64: 32, 128>}, {pipeline_mode = #tpu.pipeline_mode<synchronous>, transform_indices = @transform_2, window_bounds = array<i64: 1, 128>}, {pipeline_mode = #tpu.pipeline_mode<synchronous>, transform_indices = @transform_3, window_bounds = array<i64: 128, 128>}, {pipeline_mode = #tpu.pipeline_mode<synchronous>, transform_indices = @transform_4, window_bounds = array<i64: 1, 128>}, {pipeline_mode = #tpu.pipeline_mode<synchronous>, transform_indices = @transform_5, window_bounds = array<i64: 128, 64>}, {pipeline_mode = #tpu.pipeline_mode<synchronous>, transform_indices = @transform_6, window_bounds = array<i64: 1, 64>}, {pipeline_mode = #tpu.pipeline_mode<synchronous>, transform_indices = @transform_7, window_bounds = array<i64: 64, 128>}, {pipeline_mode = #tpu.pipeline_mode<synchronous>, transform_indices = @transform_8, window_bounds = array<i64: 1, 128>}, {transform_indices = @transform_9, window_bounds = array<i64: 104, 128>}]} {
    %c0 = arith.constant 0 : index
    %c0_0 = arith.constant 0 : index
    %0 = vector.load %arg1[%c0, %c0_0] : memref<104x32xbf16, #tpu.memory_space<vmem>>, vector<104x32xbf16>
    %c0_1 = arith.constant 0 : index
    %c0_2 = arith.constant 0 : index
    %1 = vector.load %arg2[%c0_1, %c0_2] : memref<32x128xbf16, #tpu.memory_space<vmem>>, vector<32x128xbf16>
    %cst = arith.constant dense<0.000000e+00> : vector<104x128xf32>
    %2 = tpu.matmul %0, %1, %cst {dimension_numbers = #tpu.dot_dimension_numbers<[1], [0], [0], [1], [0, 0, 1, 1], [], []>} : vector<104x32xbf16>, vector<32x128xbf16>, vector<104x128xf32> -> vector<104x128xf32>
    %c0_3 = arith.constant 0 : index
    %c0_4 = arith.constant 0 : index
    %3 = vector.load %arg3[%c0_3, %c0_4] : memref<1x128xf32, #tpu.memory_space<vmem>>, vector<1x128xf32>
    %4 = vector.broadcast %3 : vector<1x128xf32> to vector<104x128xf32>
    %5 = arith.addf %2, %4 : vector<104x128xf32>
    %cst_5 = arith.constant 0.000000e+00 : f32
    %6 = vector.broadcast %cst_5 : f32 to vector<104x128xf32>
    %7 = arith.maximumf %5, %6 : vector<104x128xf32>
    %8 = arith.truncf %7 : vector<104x128xf32> to vector<104x128xbf16>
    %c0_6 = arith.constant 0 : index
    %c0_7 = arith.constant 0 : index
    %9 = vector.load %arg4[%c0_6, %c0_7] : memref<128x128xbf16, #tpu.memory_space<vmem>>, vector<128x128xbf16>
    %cst_8 = arith.constant dense<0.000000e+00> : vector<104x128xf32>
    %10 = tpu.matmul %8, %9, %cst_8 {dimension_numbers = #tpu.dot_dimension_numbers<[1], [0], [0], [1], [0, 0, 1, 1], [], []>} : vector<104x128xbf16>, vector<128x128xbf16>, vector<104x128xf32> -> vector<104x128xf32>
    %c0_9 = arith.constant 0 : index
    %c0_10 = arith.constant 0 : index
    %11 = vector.load %arg5[%c0_9, %c0_10] : memref<1x128xf32, #tpu.memory_space<vmem>>, vector<1x128xf32>
    %12 = vector.broadcast %11 : vector<1x128xf32> to vector<104x128xf32>
    %13 = arith.addf %10, %12 : vector<104x128xf32>
    %cst_11 = arith.constant 0.000000e+00 : f32
    %14 = vector.broadcast %cst_11 : f32 to vector<104x128xf32>
    %15 = arith.maximumf %13, %14 : vector<104x128xf32>
    %16 = arith.truncf %15 : vector<104x128xf32> to vector<104x128xbf16>
    %c0_12 = arith.constant 0 : index
    %c0_13 = arith.constant 0 : index
    %17 = vector.load %arg6[%c0_12, %c0_13] : memref<128x64xbf16, #tpu.memory_space<vmem>>, vector<128x64xbf16>
    %cst_14 = arith.constant dense<0.000000e+00> : vector<104x64xf32>
    %18 = tpu.matmul %16, %17, %cst_14 {dimension_numbers = #tpu.dot_dimension_numbers<[1], [0], [0], [1], [0, 0, 1, 1], [], []>} : vector<104x128xbf16>, vector<128x64xbf16>, vector<104x64xf32> -> vector<104x64xf32>
    %c0_15 = arith.constant 0 : index
    %c0_16 = arith.constant 0 : index
    %19 = vector.load %arg7[%c0_15, %c0_16] : memref<1x64xf32, #tpu.memory_space<vmem>>, vector<1x64xf32>
    %20 = vector.broadcast %19 : vector<1x64xf32> to vector<104x64xf32>
    %21 = arith.addf %18, %20 : vector<104x64xf32>
    %cst_17 = arith.constant 0.000000e+00 : f32
    %22 = vector.broadcast %cst_17 : f32 to vector<104x64xf32>
    %23 = arith.maximumf %21, %22 : vector<104x64xf32>
    %24 = arith.truncf %23 : vector<104x64xf32> to vector<104x64xbf16>
    %c0_18 = arith.constant 0 : index
    %c0_19 = arith.constant 0 : index
    %25 = vector.load %arg8[%c0_18, %c0_19] : memref<64x128xbf16, #tpu.memory_space<vmem>>, vector<64x128xbf16>
    %cst_20 = arith.constant dense<0.000000e+00> : vector<104x128xf32>
    %26 = tpu.matmul %24, %25, %cst_20 {dimension_numbers = #tpu.dot_dimension_numbers<[1], [0], [0], [1], [0, 0, 1, 1], [], []>} : vector<104x64xbf16>, vector<64x128xbf16>, vector<104x128xf32> -> vector<104x128xf32>
    %c0_21 = arith.constant 0 : index
    %c0_22 = arith.constant 0 : index
    %27 = vector.load %arg9[%c0_21, %c0_22] : memref<1x128xf32, #tpu.memory_space<vmem>>, vector<1x128xf32>
    %28 = vector.broadcast %27 : vector<1x128xf32> to vector<104x128xf32>
    %29 = arith.addf %26, %28 : vector<104x128xf32>
    %c0_23 = arith.constant 0 : index
    %c0_24 = arith.constant 0 : index
    %30 = vector.load %arg10[%c0_23, %c0_24] : memref<104x128xf32, #tpu.memory_space<vmem>>, vector<104x128xf32>
    tpu.vector_store %arg10[%c0_23, %c0_24], %29 {strides = array<i32>} : memref<104x128xf32, #tpu.memory_space<vmem>>, vector<104x128xf32>,
    return
  }
  func.func @transform_0(%arg0: i32) -> (i32, i32) {
    %c0_i32 = arith.constant 0 : i32
    %c0_i32_0 = arith.constant 0 : i32
    return %arg0, %c0_i32 : i32, i32
  }
  func.func @transform_1(%arg0: i32) -> (i32, i32) {
    %c0_i32 = arith.constant 0 : i32
    %c0_i32_0 = arith.constant 0 : i32
    %c0_i32_1 = arith.constant 0 : i32
    return %c0_i32, %c0_i32_0 : i32, i32
  }
  func.func @transform_2(%arg0: i32) -> (i32, i32) {
    %c0_i32 = arith.constant 0 : i32
    %c0_i32_0 = arith.constant 0 : i32
    %c0_i32_1 = arith.constant 0 : i32
    return %c0_i32, %c0_i32_0 : i32, i32
  }
  func.func @transform_3(%arg0: i32) -> (i32, i32) {
    %c0_i32 = arith.constant 0 : i32
    %c0_i32_0 = arith.constant 0 : i32
    %c0_i32_1 = arith.constant 0 : i32
    return %c0_i32, %c0_i32_0 : i32, i32
  }
  func.func @transform_4(%arg0: i32) -> (i32, i32) {
    %c0_i32 = arith.constant 0 : i32
    %c0_i32_0 = arith.constant 0 : i32
    %c0_i32_1 = arith.constant 0 : i32
    return %c0_i32, %c0_i32_0 : i32, i32
  }
  func.func @transform_5(%arg0: i32) -> (i32, i32) {
    %c0_i32 = arith.constant 0 : i32
    %c0_i32_0 = arith.constant 0 : i32
    %c0_i32_1 = arith.constant 0 : i32
    return %c0_i32, %c0_i32_0 : i32, i32
  }
  func.func @transform_6(%arg0: i32) -> (i32, i32) {
    %c0_i32 = arith.constant 0 : i32
    %c0_i32_0 = arith.constant 0 : i32
    %c0_i32_1 = arith.constant 0 : i32
    return %c0_i32, %c0_i32_0 : i32, i32
  }
  func.func @transform_7(%arg0: i32) -> (i32, i32) {
    %c0_i32 = arith.constant 0 : i32
    %c0_i32_0 = arith.constant 0 : i32
    %c0_i32_1 = arith.constant 0 : i32
    return %c0_i32, %c0_i32_0 : i32, i32
  }
  func.func @transform_8(%arg0: i32) -> (i32, i32) {
    %c0_i32 = arith.constant 0 : i32
    %c0_i32_0 = arith.constant 0 : i32
    %c0_i32_1 = arith.constant 0 : i32
    return %c0_i32, %c0_i32_0 : i32, i32
  }
  func.func @transform_9(%arg0: i32) -> (i32, i32) {
    %c0_i32 = arith.constant 0 : i32
    %c0_i32_0 = arith.constant 0 : i32
    return %arg0, %c0_i32 : i32, i32
  }
}

</mosaic_0001>

<llo_original>
// kernel: tpu_custom_call.1
$region0: #{tpu_custom_call.1}
  #allocation0 [shape = 'u32[]', space=smem, size = 0x4, offset = 0x4, fixed_abs, tag = 'smem constant byte address 0x4 - core index']
  #allocation1 [shape = 'u32[144,128]{1,0:T(1,128)}', space=vmem, size = 0x12000, scoped, tag = 'internal scratch']
  %s0 = inlined_call_operand.vmem [shape: bf16[208,32], index: 0, kind: input, shape index: {}]
  %s1 = inlined_call_operand.vmem [shape: bf16[32,128], index: 1, kind: input, shape index: {}]
  %s2 = inlined_call_operand.vmem [shape: f32[1,128], index: 2, kind: input, shape index: {}]
  %s3 = inlined_call_operand.vmem [shape: bf16[128,128], index: 3, kind: input, shape index: {}]
  %s4 = inlined_call_operand.vmem [shape: f32[1,128], index: 4, kind: input, shape index: {}]
  %s5 = inlined_call_operand.vmem [shape: bf16[128,64], index: 5, kind: input, shape index: {}]
  %s6 = inlined_call_operand.vmem [shape: f32[1,64], index: 6, kind: input, shape index: {}]
  %s7 = inlined_call_operand.vmem [shape: bf16[64,128], index: 7, kind: input, shape index: {}]
  %s8 = inlined_call_operand.vmem [shape: f32[1,128], index: 8, kind: input, shape index: {}]
  %s9 = inlined_call_operand.hbm [shape: f32[208,128], index: 9, kind: output, shape index: {}]
  %s10 = sld [smem:[#allocation0]]
  $region69: #{tpu_custom_call.1} parent=0
    _
  %s12 = ssub.s32 1, %s10
  %s13 = scalar_select 0, %s12, %s10
  $region1: #{tpu_custom_call.1} parent=0
    #allocation2 [shape = 'u8[106496]{0}', space=vmem, size = 0x1a000, scoped, tag = 'output window, operand 0']
    #allocation3 [shape = 's32[2]{0}', space=sflag, size = 0x8, scoped, tag = 'scoped memory for tpu_custom_call.1']
    %14 = vsyncpa [#allocation3], 0
    %s15 = scalar_lea.sflag [#allocation3], 1
    %16 = vsyncpa %s15, 0
    loop: start=0, step=1, limit=4
    $region2: #{tpu_custom_call.1} parent=1 // loop_pre_header
      _
    $region3: #{tpu_custom_call.1} parent=1 // loop_header
      %s18 = sphi 0, %s22
      %p19 = scmp.ge.s32.totalorder %s18, 4
      %s28 = sphi 0, %s30
      %s31 = sphi 0, %s28
      %s32 = sphi 0, %s31
      %s48 = sphi 0, %s32
      %s52 = sphi 0, %s52
      %s54 = sphi 0, %s52
      %s55 = sphi 0, %s54
      %s69 = sphi 0, %s55
      %s73 = sphi 0, %s73
      %s75 = sphi 0, %s73
      %s76 = sphi 0, %s75
      %s90 = sphi 0, %s76
      %s94 = sphi 0, %s94
      %s96 = sphi 0, %s94
      %s97 = sphi 0, %s96
      %s111 = sphi 0, %s97
      %s115 = sphi 0, %s115
      %s117 = sphi 0, %s115
      %s118 = sphi 0, %s117
      %s132 = sphi 0, %s118
      %s136 = sphi 0, %s136
      %s138 = sphi 0, %s136
      %s139 = sphi 0, %s138
      %s153 = sphi 0, %s139
      %s157 = sphi 0, %s157
      %s159 = sphi 0, %s157
      %s160 = sphi 0, %s159
      %s174 = sphi 0, %s160
      %s178 = sphi 0, %s178
      %s180 = sphi 0, %s178
      %s181 = sphi 0, %s180
      %s195 = sphi 0, %s181
      %s199 = sphi 0, %s199
      %s201 = sphi 0, %s199
      %s202 = sphi 0, %s201
      %s216 = sphi 0, %s202
      %s222 = sphi 0, %s224
      %s225 = sphi 0, %s222
      %s226 = sphi 0, %s225
      %s242 = sphi 0, %s226
    $region4: #{tpu_custom_call.1} parent=1 // loop_header_branch
      %21 = sbr.rel (%p19) target = $region8
    $region5: #{tpu_custom_call.1} parent=1 // loop_body
      %s23 = ssub.s32 %s18, 1
      %s24 = ssub.s32 %s18, 2
      %s25 = sadd.s32 %s18, 1
      %s26 = ssub.s32 %s18, %s25
      %p27 = scmp.eq.s32.totalorder %s26, 0
      %s29 = sadd.s32 %s28, 1
      %s30 = scalar_select %p27, %s28, %s29
      %p33 = pneg %p27
      %p34 = scmp.eq.s32.totalorder %s18, 1
      %p35 = por %p33, %p34
      %p36 = scmp.ne.s32.totalorder %s28, %s31
      %p37 = scmp.eq.s32.totalorder %s18, 0
      %p38 = por %p36, %p37
      %p39 = scmp.ne.s32.totalorder %s28, %s31
      %p40 = scmp.eq.s32.totalorder %s23, 1
      %p41 = por %p39, %p40
      %p42 = scmp.ne.s32.totalorder %s31, %s32
      %p43 = scmp.eq.s32.totalorder %s23, 0
      %p44 = por %p42, %p43
      %p45 = scmp.ne.s32.totalorder %s31, %s32
      %p46 = scmp.eq.s32.totalorder %s24, 1
      %p47 = por %p45, %p46
      %p49 = scmp.ne.s32.totalorder %s32, %s48
      %p50 = scmp.eq.s32.totalorder %s24, 0
      %p51 = por %p49, %p50
      %s53 = sadd.s32 %s52, 1
      %p56 = scmp.eq.s32.totalorder %s18, 1
      %p57 = scmp.ne.s32.totalorder %s52, %s54
      %p58 = scmp.eq.s32.totalorder %s18, 0
      %p59 = por %p57, %p58
      %p60 = scmp.ne.s32.totalorder %s52, %s54
      %p61 = scmp.eq.s32.totalorder %s23, 1
      %p62 = por %p60, %p61
      %p63 = scmp.ne.s32.totalorder %s54, %s55
      %p64 = scmp.eq.s32.totalorder %s23, 0
      %p65 = por %p63, %p64
      %p66 = scmp.ne.s32.totalorder %s54, %s55
      %p67 = scmp.eq.s32.totalorder %s24, 1
      %p68 = por %p66, %p67
      %p70 = scmp.ne.s32.totalorder %s55, %s69
      %p71 = scmp.eq.s32.totalorder %s24, 0
      %p72 = por %p70, %p71
      %s74 = sadd.s32 %s73, 1
      %p77 = scmp.eq.s32.totalorder %s18, 1
      %p78 = scmp.ne.s32.totalorder %s73, %s75
      %p79 = scmp.eq.s32.totalorder %s18, 0
      %p80 = por %p78, %p79
      %p81 = scmp.ne.s32.totalorder %s73, %s75
      %p82 = scmp.eq.s32.totalorder %s23, 1
      %p83 = por %p81, %p82
      %p84 = scmp.ne.s32.totalorder %s75, %s76
      %p85 = scmp.eq.s32.totalorder %s23, 0
      %p86 = por %p84, %p85
      %p87 = scmp.ne.s32.totalorder %s75, %s76
      %p88 = scmp.eq.s32.totalorder %s24, 1
      %p89 = por %p87, %p88
      %p91 = scmp.ne.s32.totalorder %s76, %s90
      %p92 = scmp.eq.s32.totalorder %s24, 0
      %p93 = por %p91, %p92
      %s95 = sadd.s32 %s94, 1
      %p98 = scmp.eq.s32.totalorder %s18, 1
      %p99 = scmp.ne.s32.totalorder %s94, %s96
      %p100 = scmp.eq.s32.totalorder %s18, 0
      %p101 = por %p99, %p100
      %p102 = scmp.ne.s32.totalorder %s94, %s96
      %p103 = scmp.eq.s32.totalorder %s23, 1
      %p104 = por %p102, %p103
      %p105 = scmp.ne.s32.totalorder %s96, %s97
      %p106 = scmp.eq.s32.totalorder %s23, 0
      %p107 = por %p105, %p106
      %p108 = scmp.ne.s32.totalorder %s96, %s97
      %p109 = scmp.eq.s32.totalorder %s24, 1
      %p110 = por %p108, %p109
      %p112 = scmp.ne.s32.totalorder %s97, %s111
      %p113 = scmp.eq.s32.totalorder %s24, 0
      %p114 = por %p112, %p113
      %s116 = sadd.s32 %s115, 1
      %p119 = scmp.eq.s32.totalorder %s18, 1
      %p120 = scmp.ne.s32.totalorder %s115, %s117
      %p121 = scmp.eq.s32.totalorder %s18, 0
      %p122 = por %p120, %p121
      %p123 = scmp.ne.s32.totalorder %s115, %s117
      %p124 = scmp.eq.s32.totalorder %s23, 1
      %p125 = por %p123, %p124
      %p126 = scmp.ne.s32.totalorder %s117, %s118
      %p127 = scmp.eq.s32.totalorder %s23, 0
      %p128 = por %p126, %p127
      %p129 = scmp.ne.s32.totalorder %s117, %s118
      %p130 = scmp.eq.s32.totalorder %s24, 1
      %p131 = por %p129, %p130
      %p133 = scmp.ne.s32.totalorder %s118, %s132
      %p134 = scmp.eq.s32.totalorder %s24, 0
      %p135 = por %p133, %p134
      %s137 = sadd.s32 %s136, 1
      %p140 = scmp.eq.s32.totalorder %s18, 1
      %p141 = scmp.ne.s32.totalorder %s136, %s138
      %p142 = scmp.eq.s32.totalorder %s18, 0
      %p143 = por %p141, %p142
      %p144 = scmp.ne.s32.totalorder %s136, %s138
      %p145 = scmp.eq.s32.totalorder %s23, 1
      %p146 = por %p144, %p145
      %p147 = scmp.ne.s32.totalorder %s138, %s139
      %p148 = scmp.eq.s32.totalorder %s23, 0
      %p149 = por %p147, %p148
      %p150 = scmp.ne.s32.totalorder %s138, %s139
      %p151 = scmp.eq.s32.totalorder %s24, 1
      %p152 = por %p150, %p151
      %p154 = scmp.ne.s32.totalorder %s139, %s153
      %p155 = scmp.eq.s32.totalorder %s24, 0
      %p156 = por %p154, %p155
      %s158 = sadd.s32 %s157, 1
      %p161 = scmp.eq.s32.totalorder %s18, 1
      %p162 = scmp.ne.s32.totalorder %s157, %s159
      %p163 = scmp.eq.s32.totalorder %s18, 0
      %p164 = por %p162, %p163
      %p165 = scmp.ne.s32.totalorder %s157, %s159
      %p166 = scmp.eq.s32.totalorder %s23, 1
      %p167 = por %p165, %p166
      %p168 = scmp.ne.s32.totalorder %s159, %s160
      %p169 = scmp.eq.s32.totalorder %s23, 0
      %p170 = por %p168, %p169
      %p171 = scmp.ne.s32.totalorder %s159, %s160
      %p172 = scmp.eq.s32.totalorder %s24, 1
      %p173 = por %p171, %p172
      %p175 = scmp.ne.s32.totalorder %s160, %s174
      %p176 = scmp.eq.s32.totalorder %s24, 0
      %p177 = por %p175, %p176
      %s179 = sadd.s32 %s178, 1
      %p182 = scmp.eq.s32.totalorder %s18, 1
      %p183 = scmp.ne.s32.totalorder %s178, %s180
      %p184 = scmp.eq.s32.totalorder %s18, 0
      %p185 = por %p183, %p184
      %p186 = scmp.ne.s32.totalorder %s178, %s180
      %p187 = scmp.eq.s32.totalorder %s23, 1
      %p188 = por %p186, %p187
      %p189 = scmp.ne.s32.totalorder %s180, %s181
      %p190 = scmp.eq.s32.totalorder %s23, 0
      %p191 = por %p189, %p190
      %p192 = scmp.ne.s32.totalorder %s180, %s181
      %p193 = scmp.eq.s32.totalorder %s24, 1
      %p194 = por %p192, %p193
      %p196 = scmp.ne.s32.totalorder %s181, %s195
      %p197 = scmp.eq.s32.totalorder %s24, 0
      %p198 = por %p196, %p197
      %s200 = sadd.s32 %s199, 1
      %p203 = scmp.eq.s32.totalorder %s18, 1
      %p204 = scmp.ne.s32.totalorder %s199, %s201
      %p205 = scmp.eq.s32.totalorder %s18, 0
      %p206 = por %p204, %p205
      %p207 = scmp.ne.s32.totalorder %s199, %s201
      %p208 = scmp.eq.s32.totalorder %s23, 1
      %p209 = por %p207, %p208
      %p210 = scmp.ne.s32.totalorder %s201, %s202
      %p211 = scmp.eq.s32.totalorder %s23, 0
      %p212 = por %p210, %p211
      %p213 = scmp.ne.s32.totalorder %s201, %s202
      %p214 = scmp.eq.s32.totalorder %s24, 1
      %p215 = por %p213, %p214
      %p217 = scmp.ne.s32.totalorder %s202, %s216
      %p218 = scmp.eq.s32.totalorder %s24, 0
      %p219 = por %p217, %p218
      %s220 = ssub.s32 %s18, %s25
      %p221 = scmp.eq.s32.totalorder %s220, 0
      %s223 = sadd.s32 %s222, 1
      %s224 = scalar_select %p221, %s222, %s223
      %p227 = pneg %p221
      %p228 = scmp.eq.s32.totalorder %s18, 1
      %p229 = por %p227, %p228
      %p230 = scmp.ne.s32.totalorder %s222, %s225
      %p231 = scmp.eq.s32.totalorder %s18, 0
      %p232 = por %p230, %p231
      %p233 = scmp.ne.s32.totalorder %s222, %s225
      %p234 = scmp.eq.s32.totalorder %s23, 1
      %p235 = por %p233, %p234
      %p236 = scmp.ne.s32.totalorder %s225, %s226
      %p237 = scmp.eq.s32.totalorder %s23, 0
      %p238 = por %p236, %p237
      %p239 = scmp.ne.s32.totalorder %s225, %s226
      %p240 = scmp.eq.s32.totalorder %s24, 1
      %p241 = por %p239, %p240
      %p243 = scmp.ne.s32.totalorder %s226, %s242
      %p244 = scmp.eq.s32.totalorder %s24, 0
      %p245 = por %p243, %p244
      %p246 = scmp.le.s32.totalorder 1, %s18
      %p247 = scmp.lt.s32.totalorder %s18, 3
      %p248 = pnand %p246, %p247
      %p249 = pneg %p248
      // Predicated region
      $region9: #{tpu_custom_call.1} parent=5 // pred_check
        _
      $region10: #{tpu_custom_call.1} parent=5 // pred_check_branch
        %251 = sbr.rel (%p248) target = $region12
      $region11: #{tpu_custom_call.1} parent=5 // pred_region
        %s252 = ssub.s32 %s18, 1
        // Predicated region
        $region13: #{tpu_custom_call.1} parent=11 // pred_check
          %p253 = pneg %p65
        $region14: #{tpu_custom_call.1} parent=11 // pred_check_branch
          %255 = sbr.rel (%p253) target = $region16
        $region15: #{tpu_custom_call.1} parent=11 // pred_region
          _
        $region16: #{tpu_custom_call.1} parent=11 // pred_fallthru
          _
        // Predicated region
        $region17: #{tpu_custom_call.1} parent=11 // pred_check
          %p256 = pneg %p86
        $region18: #{tpu_custom_call.1} parent=11 // pred_check_branch
          %258 = sbr.rel (%p256) target = $region20
        $region19: #{tpu_custom_call.1} parent=11 // pred_region
          _
        $region20: #{tpu_custom_call.1} parent=11 // pred_fallthru
          _
        // Predicated region
        $region21: #{tpu_custom_call.1} parent=11 // pred_check
          %p259 = pneg %p107
        $region22: #{tpu_custom_call.1} parent=11 // pred_check_branch
          %261 = sbr.rel (%p259) target = $region24
        $region23: #{tpu_custom_call.1} parent=11 // pred_region
          _
        $region24: #{tpu_custom_call.1} parent=11 // pred_fallthru
          _
        // Predicated region
        $region25: #{tpu_custom_call.1} parent=11 // pred_check
          %p262 = pneg %p128
        $region26: #{tpu_custom_call.1} parent=11 // pred_check_branch
          %264 = sbr.rel (%p262) target = $region28
        $region27: #{tpu_custom_call.1} parent=11 // pred_region
          _
        $region28: #{tpu_custom_call.1} parent=11 // pred_fallthru
          _
        // Predicated region
        $region29: #{tpu_custom_call.1} parent=11 // pred_check
          %p265 = pneg %p149
        $region30: #{tpu_custom_call.1} parent=11 // pred_check_branch
          %267 = sbr.rel (%p265) target = $region32
        $region31: #{tpu_custom_call.1} parent=11 // pred_region
          _
        $region32: #{tpu_custom_call.1} parent=11 // pred_fallthru
          _
        // Predicated region
        $region33: #{tpu_custom_call.1} parent=11 // pred_check
          %p268 = pneg %p170
        $region34: #{tpu_custom_call.1} parent=11 // pred_check_branch
          %270 = sbr.rel (%p268) target = $region36
        $region35: #{tpu_custom_call.1} parent=11 // pred_region
          _
        $region36: #{tpu_custom_call.1} parent=11 // pred_fallthru
          _
        // Predicated region
        $region37: #{tpu_custom_call.1} parent=11 // pred_check
          %p271 = pneg %p191
        $region38: #{tpu_custom_call.1} parent=11 // pred_check_branch
          %273 = sbr.rel (%p271) target = $region40
        $region39: #{tpu_custom_call.1} parent=11 // pred_region
          _
        $region40: #{tpu_custom_call.1} parent=11 // pred_fallthru
          _
        // Predicated region
        $region41: #{tpu_custom_call.1} parent=11 // pred_check
          %p274 = pneg %p212
        $region42: #{tpu_custom_call.1} parent=11 // pred_check_branch
          %276 = sbr.rel (%p274) target = $region44
        $region43: #{tpu_custom_call.1} parent=11 // pred_region
          _
        $region44: #{tpu_custom_call.1} parent=11 // pred_fallthru
          _
      $region12: #{tpu_custom_call.1} parent=5 // pred_fallthru
        _
      %p277 = scmp.lt.s32.totalorder %s18, 2
      // Predicated region
      $region45: #{tpu_custom_call.1} parent=5 // pred_check
        %p278 = pneg %p277
      $region46: #{tpu_custom_call.1} parent=5 // pred_check_branch
        %280 = sbr.rel (%p278) target = $region48
      $region47: #{tpu_custom_call.1} parent=5 // pred_region
        // Predicated region
        $region49: #{tpu_custom_call.1} parent=47 // pred_check
          %p281 = pneg %p38
        $region50: #{tpu_custom_call.1} parent=47 // pred_check_branch
          %283 = sbr.rel (%p281) target = $region52
        $region51: #{tpu_custom_call.1} parent=47 // pred_region
          %s284 = smul.u32 13, %s18
          %p285 = scmp.lt.s32.totalorder %s284, 25
          %s286 = scalar_select %p285, %s284, 25
          %s287 = smul.addr %s286, 4
          %s288 = scalar_lea.vmem %s0, %s287
          %s289 = smul.u32 13, %s18
        $region52: #{tpu_custom_call.1} parent=47 // pred_fallthru
          _
      $region48: #{tpu_custom_call.1} parent=5 // pred_fallthru
        _
      %p290 = scmp.le.s32.totalorder 1, %s18
      %p291 = scmp.lt.s32.totalorder %s18, 3
      %p292 = pnand %p290, %p291
      %p293 = pneg %p292
      // Predicated region
      $region53: #{tpu_custom_call.1} parent=5 // pred_check
        _
      $region54: #{tpu_custom_call.1} parent=5 // pred_check_branch
        %295 = sbr.rel (%p292) target = $region56
      $region55: #{tpu_custom_call.1} parent=5 // pred_region
        %s296 = ssub.s32 %s18, 1
        %s297 = smul.u32 13, %s23
        %p298 = scmp.lt.s32.totalorder %s297, 25
        %s299 = scalar_select %p298, %s297, 25
        %s300 = smul.addr %s299, 4
        %s301 = scalar_lea.vmem %s0, %s300
        %p302 = pneg %p44
        %p303 = pneg %p41
        %p304 = pneg %p65
        %p305 = pneg %p62
        %p306 = pneg %p86
        %p307 = pneg %p83
        %p308 = pneg %p107
        %p309 = pneg %p104
        %p310 = pneg %p128
        %p311 = pneg %p125
        %p312 = pneg %p149
        %p313 = pneg %p146
        %p314 = pneg %p170
        %p315 = pneg %p167
        %p316 = pneg %p191
        %p317 = pneg %p188
        %p318 = pneg %p212
        %p319 = pneg %p209
        %p320 = pneg %p238
        %p321 = pneg %p235
        %s322 = sand.u32 %s225, 1
        %s323 = scalar_lea.sflag [#allocation3], %s322
        %s324 = sand.u32 %s225, 1
        %s325 = smul.addr %s324, 104
        %s326 = scalar_lea.vmem [#allocation2], %s325
        %s327 = smul.u32 13, %s23
        %p328 = scmp.lt.s32.totalorder %s327, 25
        %s329 = scalar_select %p328, %s327, 25
        %s330 = smul.addr %s329, 4
        %s331 = scalar_lea.vmem %s0, %s330
        %s332 = smul.u32 13, %s23
        %s333 = smul.u32 13, %s23
        %v335 = vld [vmem:[%s331] sm:$0xf]
        %v336 = vld [vmem:[%s331 + $0x4] sm:$0xf]
        %v337 = vld [vmem:[%s331 + $0x8] sm:$0xf]
        %v338 = vld [vmem:[%s331 + $0xc] sm:$0xf]
        %v339 = vld [vmem:[%s331 + $0x10] sm:$0xf]
        %v340 = vld [vmem:[%s331 + $0x14] sm:$0xf]
        %v341 = vld [vmem:[%s331 + $0x18] sm:$0xf]
        %v342 = vld [vmem:[%s331 + $0x1c] sm:$0xf]
        %v343 = vld [vmem:[%s331 + $0x20] sm:$0xf]
        %v344 = vld [vmem:[%s331 + $0x24] sm:$0xf]
        %v345 = vld [vmem:[%s331 + $0x28] sm:$0xf]
        %v346 = vld [vmem:[%s331 + $0x2c] sm:$0xf]
        %v347 = vld [vmem:[%s331 + $0x30] sm:$0xf]
        %v348 = vld [vmem:[%s1] sm:$0xf]
        %v349 = vld [vmem:[%s1 + $0x4] sm:$0xf]
        %v350 = vld [vmem:[%s1 + $0x8] sm:$0xf]
        %v351 = vld [vmem:[%s1 + $0xc] sm:$0xf]
        %v352 = vld [vmem:[%s2] sm:$0x1]
        %v354 = vlaneseq
        %v355 = vshrl.u32 %v354, 7
        %v356 = vsub.s32 0, %v355
        %v357 = vrot.slane %v352, %v356
        %v372 = vunpack.c.l.b16 %v335
        %v373 = vunpack.c.l.b16 %v336
        %v374 = vunpack.c.l.b16 %v337
        %v375 = vunpack.c.l.b16 %v338
        %v376 = vunpack.c.l.b16 %v339
        %v377 = vunpack.c.l.b16 %v340
        %v378 = vunpack.c.l.b16 %v341
        %v379 = vunpack.c.l.b16 %v342
        %v380 = vunpack.c.l.b16 %v343
        %v381 = vunpack.c.l.b16 %v344
        %v382 = vunpack.c.l.b16 %v345
        %v383 = vunpack.c.l.b16 %v346
        %v384 = vunpack.c.l.b16 %v347
        %v385 = vpack.c.b16 %v373, %v372
        %v386 = vpack.c.b16 %v375, %v374
        %v387 = vpack.c.b16 %v377, %v376
        %v388 = vpack.c.b16 %v379, %v378
        %v389 = vpack.c.b16 %v381, %v380
        %v390 = vpack.c.b16 %v383, %v382
        %v391 = vpack.c.b16 %v384, %v384
        %v396 = vunpack.c.l.b16 %v348
        %v397 = vunpack.c.l.b16 %v349
        %v398 = vunpack.c.l.b16 %v350
        %v399 = vunpack.c.l.b16 %v351
        %v400 = vpack.c.b16 %v397, %v396
        %v401 = vpack.c.b16 %v399, %v398
        %vm404 = vcmask 261120
        %v406 = vsel %vm404, %v385, 0
        %v409 = vsel %vm404, %v386, 0
        %v412 = vsel %vm404, %v387, 0
        %v415 = vsel %vm404, %v388, 0
        %v418 = vsel %vm404, %v389, 0
        %v421 = vsel %vm404, %v390, 0
        %v424 = vsel %vm404, %v391, 0
        %426 = vmatprep.subr.bf16.mxu0 0
        %427 = vmatpush1.bf16.msra.mxu0 %v400
        %428 = vmatprep.subr.bf16.mxu0 0
        %429 = vmatpush1.bf16.msra.mxu0 %v401
        %430 = vmatprep.subr.bf16.mxu0 0
        %431 = vmatpush1.bf16.msra.mxu0 0
        %432 = vmatprep.subr.bf16.mxu0 0
        %433 = vmatpush1.bf16.msra.mxu0 0
        %434 = vmatprep.subr.bf16.mxu0 0
        %435 = vmatpush1.bf16.msra.mxu0 0
        %436 = vmatprep.subr.bf16.mxu0 0
        %437 = vmatpush1.bf16.msra.mxu0 0
        %438 = vmatprep.subr.bf16.mxu0 0
        %439 = vmatpush1.bf16.msra.mxu0 0
        %440 = vmatprep.subr.bf16.mxu0 0
        %441 = vmatpush1.bf16.msra.mxu0 0
        %442 = vmatprep.subr.bf16.mxu0 0
        %443 = vmatpush1.bf16.msra.mxu0 0
        %444 = vmatprep.subr.bf16.mxu0 0
        %445 = vmatpush1.bf16.msra.mxu0 0
        %446 = vmatprep.subr.bf16.mxu0 0
        %447 = vmatpush1.bf16.msra.mxu0 0
        %448 = vmatprep.subr.bf16.mxu0 0
        %449 = vmatpush1.bf16.msra.mxu0 0
        %450 = vmatprep.subr.bf16.mxu0 0
        %451 = vmatpush1.bf16.msra.mxu0 0
        %452 = vmatprep.subr.bf16.mxu0 0
        %453 = vmatpush1.bf16.msra.mxu0 0
        %454 = vmatprep.subr.bf16.mxu0 0
        %455 = vmatpush1.bf16.msra.mxu0 0
        %456 = vmatprep.subr.bf16.mxu0 0
        %457 = vmatpush1.bf16.msra.mxu0 0
        %458 = vmatprep.mubr.bf16.mxu0 0
        %459 = vmatmul.mubr.bf16.gmra.mrb[0].mxu0 %v406
        %v460 = vpop.f32.mrb[0].mxu0
        %v461 = vadd.f32 %v357, %v460
        %v462 = vpop.f32.mrb[0].mxu0
        %v463 = vpop.f32.mrb[0].mxu0
        %v464 = vadd.f32 %v357, %v463
        %v465 = vpop.f32.mrb[0].mxu0
        %466 = vmatprep.mubr.bf16.mxu0 0
        %467 = vmatmul.mubr.bf16.gmra.mrb[0].mxu0 %v409
        %v468 = vpop.f32.mrb[0].mxu0
        %v469 = vadd.f32 %v357, %v468
        %v470 = vpop.f32.mrb[0].mxu0
        %v471 = vpop.f32.mrb[0].mxu0
        %v472 = vadd.f32 %v357, %v471
        %v473 = vpop.f32.mrb[0].mxu0
        %474 = vmatprep.mubr.bf16.mxu0 0
        %475 = vmatmul.mubr.bf16.gmra.mrb[0].mxu0 %v412
        %v476 = vpop.f32.mrb[0].mxu0
        %v477 = vadd.f32 %v357, %v476
        %v478 = vpop.f32.mrb[0].mxu0
        %v479 = vpop.f32.mrb[0].mxu0
        %v480 = vadd.f32 %v357, %v479
        %v481 = vpop.f32.mrb[0].mxu0
        %482 = vmatprep.mubr.bf16.mxu0 0
        %483 = vmatmul.mubr.bf16.gmra.mrb[0].mxu0 %v415
        %v484 = vpop.f32.mrb[0].mxu0
        %v485 = vadd.f32 %v357, %v484
        %v486 = vpop.f32.mrb[0].mxu0
        %v487 = vpop.f32.mrb[0].mxu0
        %v488 = vadd.f32 %v357, %v487
        %v489 = vpop.f32.mrb[0].mxu0
        %490 = vmatprep.mubr.bf16.mxu0 0
        %491 = vmatmul.mubr.bf16.gmra.mrb[0].mxu0 %v418
        %v492 = vpop.f32.mrb[0].mxu0
        %v493 = vadd.f32 %v357, %v492
        %v494 = vpop.f32.mrb[0].mxu0
        %v495 = vpop.f32.mrb[0].mxu0
        %v496 = vadd.f32 %v357, %v495
        %v497 = vpop.f32.mrb[0].mxu0
        %498 = vmatprep.mubr.bf16.mxu0 0
        %499 = vmatmul.mubr.bf16.gmra.mrb[0].mxu0 %v421
        %v500 = vpop.f32.mrb[0].mxu0
        %v501 = vadd.f32 %v357, %v500
        %v502 = vpop.f32.mrb[0].mxu0
        %v503 = vpop.f32.mrb[0].mxu0
        %v504 = vadd.f32 %v357, %v503
        %v505 = vpop.f32.mrb[0].mxu0
        %506 = vmatprep.mubr.bf16.mxu0 0
        %507 = vmatmul.mubr.bf16.gmra.mrb[0].mxu0 %v424
        %v508 = vpop.f32.mrb[0].mxu0
        %v509 = vadd.f32 %v357, %v508
        %v510 = vpop.f32.mrb[0].mxu0
        %v511 = vpop.f32.mrb[0].mxu0
        %v512 = vpop.f32.mrb[0].mxu0
        %513 = vdwg.mxu0
        %v514 = vmax.f32 %v461, 0.0
        %v515 = vmax.f32 %v464, 0.0
        %v516 = vmax.f32 %v469, 0.0
        %v517 = vmax.f32 %v472, 0.0
        %v518 = vmax.f32 %v477, 0.0
        %v519 = vmax.f32 %v480, 0.0
        %v520 = vmax.f32 %v485, 0.0
        %v521 = vmax.f32 %v488, 0.0
        %v522 = vmax.f32 %v493, 0.0
        %v523 = vmax.f32 %v496, 0.0
        %v524 = vmax.f32 %v501, 0.0
        %v525 = vmax.f32 %v504, 0.0
        %v526 = vmax.f32 %v509, 0.0
        %v527 = vpack.c.bf16 %v515, %v514
        %v528 = vpack.c.bf16 %v517, %v516
        %v529 = vpack.c.bf16 %v519, %v518
        %v530 = vpack.c.bf16 %v521, %v520
        %v531 = vpack.c.bf16 %v523, %v522
        %v532 = vpack.c.bf16 %v525, %v524
        %v533 = vpack.c.bf16 %v526, %v526
        %v534 = vld [vmem:[%s3] sm:$0xf]
        %v535 = vld [vmem:[%s3 + $0x4] sm:$0xf]
        %v536 = vld [vmem:[%s3 + $0x8] sm:$0xf]
        %v537 = vld [vmem:[%s3 + $0xc] sm:$0xf]
        %v538 = vld [vmem:[%s3 + $0x10] sm:$0xf]
        %v539 = vld [vmem:[%s3 + $0x14] sm:$0xf]
        %v540 = vld [vmem:[%s3 + $0x18] sm:$0xf]
        %v541 = vld [vmem:[%s3 + $0x1c] sm:$0xf]
        %v542 = vld [vmem:[%s3 + $0x20] sm:$0xf]
        %v543 = vld [vmem:[%s3 + $0x24] sm:$0xf]
        %v544 = vld [vmem:[%s3 + $0x28] sm:$0xf]
        %v545 = vld [vmem:[%s3 + $0x2c] sm:$0xf]
        %v546 = vld [vmem:[%s3 + $0x30] sm:$0xf]
        %v547 = vld [vmem:[%s3 + $0x34] sm:$0xf]
        %v548 = vld [vmem:[%s3 + $0x38] sm:$0xf]
        %v549 = vld [vmem:[%s3 + $0x3c] sm:$0xf]
        %v550 = vld [vmem:[%s4] sm:$0x1]
        %v552 = vlaneseq
        %v553 = vshrl.u32 %v552, 7
        %v554 = vsub.s32 0, %v553
        %v555 = vrot.slane %v550, %v554
        %v573 = vunpack.c.l.b16 %v534
        %v574 = vunpack.c.l.b16 %v535
        %v575 = vunpack.c.l.b16 %v536
        %v576 = vunpack.c.l.b16 %v537
        %v577 = vunpack.c.l.b16 %v538
        %v578 = vunpack.c.l.b16 %v539
        %v579 = vunpack.c.l.b16 %v540
        %v580 = vunpack.c.l.b16 %v541
        %v581 = vunpack.c.l.b16 %v542
        %v582 = vunpack.c.l.b16 %v543
        %v583 = vunpack.c.l.b16 %v544
        %v584 = vunpack.c.l.b16 %v545
        %v585 = vunpack.c.l.b16 %v546
        %v586 = vunpack.c.l.b16 %v547
        %v587 = vunpack.c.l.b16 %v548
        %v588 = vunpack.c.l.b16 %v549
        %v589 = vpack.c.b16 %v574, %v573
        %v590 = vpack.c.b16 %v576, %v575
        %v591 = vpack.c.b16 %v578, %v577
        %v592 = vpack.c.b16 %v580, %v579
        %v593 = vpack.c.b16 %v582, %v581
        %v594 = vpack.c.b16 %v584, %v583
        %v595 = vpack.c.b16 %v586, %v585
        %v596 = vpack.c.b16 %v588, %v587
        %605 = vmatprep.subr.bf16.mxu0 0
        %606 = vmatpush1.bf16.msra.mxu0 %v589
        %607 = vmatprep.subr.bf16.mxu0 0
        %608 = vmatpush1.bf16.msra.mxu0 %v590
        %609 = vmatprep.subr.bf16.mxu0 0
        %610 = vmatpush1.bf16.msra.mxu0 %v591
        %611 = vmatprep.subr.bf16.mxu0 0
        %612 = vmatpush1.bf16.msra.mxu0 %v592
        %613 = vmatprep.subr.bf16.mxu0 0
        %614 = vmatpush1.bf16.msra.mxu0 %v593
        %615 = vmatprep.subr.bf16.mxu0 0
        %616 = vmatpush1.bf16.msra.mxu0 %v594
        %617 = vmatprep.subr.bf16.mxu0 0
        %618 = vmatpush1.bf16.msra.mxu0 %v595
        %619 = vmatprep.subr.bf16.mxu0 0
        %620 = vmatpush1.bf16.msra.mxu0 %v596
        %621 = vmatprep.subr.bf16.mxu0 0
        %622 = vmatpush1.bf16.msra.mxu0 0
        %623 = vmatprep.subr.bf16.mxu0 0
        %624 = vmatpush1.bf16.msra.mxu0 0
        %625 = vmatprep.subr.bf16.mxu0 0
        %626 = vmatpush1.bf16.msra.mxu0 0
        %627 = vmatprep.subr.bf16.mxu0 0
        %628 = vmatpush1.bf16.msra.mxu0 0
        %629 = vmatprep.subr.bf16.mxu0 0
        %630 = vmatpush1.bf16.msra.mxu0 0
        %631 = vmatprep.subr.bf16.mxu0 0
        %632 = vmatpush1.bf16.msra.mxu0 0
        %633 = vmatprep.subr.bf16.mxu0 0
        %634 = vmatpush1.bf16.msra.mxu0 0
        %635 = vmatprep.subr.bf16.mxu0 0
        %636 = vmatpush1.bf16.msra.mxu0 0
        %637 = vmatprep.mubr.bf16.mxu0 0
        %638 = vmatmul.mubr.bf16.gmra.mrb[0].mxu0 %v527
        %v639 = vpop.f32.mrb[0].mxu0
        %v640 = vadd.f32 %v555, %v639
        %v641 = vpop.f32.mrb[0].mxu0
        %v642 = vpop.f32.mrb[0].mxu0
        %v643 = vadd.f32 %v555, %v642
        %v644 = vpop.f32.mrb[0].mxu0
        %645 = vmatprep.mubr.bf16.mxu0 0
        %646 = vmatmul.mubr.bf16.gmra.mrb[0].mxu0 %v528
        %v647 = vpop.f32.mrb[0].mxu0
        %v648 = vadd.f32 %v555, %v647
        %v649 = vpop.f32.mrb[0].mxu0
        %v650 = vpop.f32.mrb[0].mxu0
        %v651 = vadd.f32 %v555, %v650
        %v652 = vpop.f32.mrb[0].mxu0
        %653 = vmatprep.mubr.bf16.mxu0 0
        %654 = vmatmul.mubr.bf16.gmra.mrb[0].mxu0 %v529
        %v655 = vpop.f32.mrb[0].mxu0
        %v656 = vadd.f32 %v555, %v655
        %v657 = vpop.f32.mrb[0].mxu0
        %v658 = vpop.f32.mrb[0].mxu0
        %v659 = vadd.f32 %v555, %v658
        %v660 = vpop.f32.mrb[0].mxu0
        %661 = vmatprep.mubr.bf16.mxu0 0
        %662 = vmatmul.mubr.bf16.gmra.mrb[0].mxu0 %v530
        %v663 = vpop.f32.mrb[0].mxu0
        %v664 = vadd.f32 %v555, %v663
        %v665 = vpop.f32.mrb[0].mxu0
        %v666 = vpop.f32.mrb[0].mxu0
        %v667 = vadd.f32 %v555, %v666
        %v668 = vpop.f32.mrb[0].mxu0
        %669 = vmatprep.mubr.bf16.mxu0 0
        %670 = vmatmul.mubr.bf16.gmra.mrb[0].mxu0 %v531
        %v671 = vpop.f32.mrb[0].mxu0
        %v672 = vadd.f32 %v555, %v671
        %v673 = vpop.f32.mrb[0].mxu0
        %v674 = vpop.f32.mrb[0].mxu0
        %v675 = vadd.f32 %v555, %v674
        %v676 = vpop.f32.mrb[0].mxu0
        %677 = vmatprep.mubr.bf16.mxu0 0
        %678 = vmatmul.mubr.bf16.gmra.mrb[0].mxu0 %v532
        %v679 = vpop.f32.mrb[0].mxu0
        %v680 = vadd.f32 %v555, %v679
        %v681 = vpop.f32.mrb[0].mxu0
        %v682 = vpop.f32.mrb[0].mxu0
        %v683 = vadd.f32 %v555, %v682
        %v684 = vpop.f32.mrb[0].mxu0
        %685 = vmatprep.mubr.bf16.mxu0 0
        %686 = vmatmul.mubr.bf16.gmra.mrb[0].mxu0 %v533
        %v687 = vpop.f32.mrb[0].mxu0
        %v688 = vadd.f32 %v555, %v687
        %v689 = vpop.f32.mrb[0].mxu0
        %v690 = vpop.f32.mrb[0].mxu0
        %v691 = vpop.f32.mrb[0].mxu0
        %692 = vdwg.mxu0
        %v693 = vmax.f32 %v640, 0.0
        %v694 = vmax.f32 %v643, 0.0
        %v695 = vmax.f32 %v648, 0.0
        %v696 = vmax.f32 %v651, 0.0
        %v697 = vmax.f32 %v656, 0.0
        %v698 = vmax.f32 %v659, 0.0
        %v699 = vmax.f32 %v664, 0.0
        %v700 = vmax.f32 %v667, 0.0
        %v701 = vmax.f32 %v672, 0.0
        %v702 = vmax.f32 %v675, 0.0
        %v703 = vmax.f32 %v680, 0.0
        %v704 = vmax.f32 %v683, 0.0
        %v705 = vmax.f32 %v688, 0.0
        %v706 = vpack.c.bf16 %v694, %v693
        %v707 = vpack.c.bf16 %v696, %v695
        %v708 = vpack.c.bf16 %v698, %v697
        %v709 = vpack.c.bf16 %v700, %v699
        %v710 = vpack.c.bf16 %v702, %v701
        %v711 = vpack.c.bf16 %v704, %v703
        %v712 = vpack.c.bf16 %v705, %v705
        %v713 = vld [vmem:[%s5] sm:$0xf]
        %v714 = vld [vmem:[%s5 + $0x4] sm:$0xf]
        %v715 = vld [vmem:[%s5 + $0x8] sm:$0xf]
        %v716 = vld [vmem:[%s5 + $0xc] sm:$0xf]
        %v717 = vld [vmem:[%s5 + $0x10] sm:$0xf]
        %v718 = vld [vmem:[%s5 + $0x14] sm:$0xf]
        %v719 = vld [vmem:[%s5 + $0x18] sm:$0xf]
        %v720 = vld [vmem:[%s5 + $0x1c] sm:$0xf]
        %v721 = vld [vmem:[%s5 + $0x20] sm:$0xf]
        %v722 = vld [vmem:[%s5 + $0x24] sm:$0xf]
        %v723 = vld [vmem:[%s5 + $0x28] sm:$0xf]
        %v724 = vld [vmem:[%s5 + $0x2c] sm:$0xf]
        %v725 = vld [vmem:[%s5 + $0x30] sm:$0xf]
        %v726 = vld [vmem:[%s5 + $0x34] sm:$0xf]
        %v727 = vld [vmem:[%s5 + $0x38] sm:$0xf]
        %v728 = vld [vmem:[%s5 + $0x3c] sm:$0xf]
        %v729 = vld [vmem:[%s6] sm:$0x1]
        %v731 = vlaneseq
        %v732 = vshrl.u32 %v731, 7
        %v733 = vsub.s32 0, %v732
        %v734 = vrot.slane %v729, %v733
        %v752 = vunpack.c.l.b16 %v713
        %v753 = vunpack.c.l.b16 %v714
        %v754 = vunpack.c.l.b16 %v715
        %v755 = vunpack.c.l.b16 %v716
        %v756 = vunpack.c.l.b16 %v717
        %v757 = vunpack.c.l.b16 %v718
        %v758 = vunpack.c.l.b16 %v719
        %v759 = vunpack.c.l.b16 %v720
        %v760 = vunpack.c.l.b16 %v721
        %v761 = vunpack.c.l.b16 %v722
        %v762 = vunpack.c.l.b16 %v723
        %v763 = vunpack.c.l.b16 %v724
        %v764 = vunpack.c.l.b16 %v725
        %v765 = vunpack.c.l.b16 %v726
        %v766 = vunpack.c.l.b16 %v727
        %v767 = vunpack.c.l.b16 %v728
        %v768 = vpack.c.b16 %v753, %v752
        %v769 = vpack.c.b16 %v755, %v754
        %v770 = vpack.c.b16 %v757, %v756
        %v771 = vpack.c.b16 %v759, %v758
        %v772 = vpack.c.b16 %v761, %v760
        %v773 = vpack.c.b16 %v763, %v762
        %v774 = vpack.c.b16 %v765, %v764
        %v775 = vpack.c.b16 %v767, %v766
        %784 = vmatprep.subr.bf16.mxu0 0
        %785 = vmatpush1.bf16.msra.mxu0 %v768
        %786 = vmatprep.subr.bf16.mxu0 0
        %787 = vmatpush1.bf16.msra.mxu0 %v769
        %788 = vmatprep.subr.bf16.mxu0 0
        %789 = vmatpush1.bf16.msra.mxu0 %v770
        %790 = vmatprep.subr.bf16.mxu0 0
        %791 = vmatpush1.bf16.msra.mxu0 %v771
        %792 = vmatprep.subr.bf16.mxu0 0
        %793 = vmatpush1.bf16.msra.mxu0 %v772
        %794 = vmatprep.subr.bf16.mxu0 0
        %795 = vmatpush1.bf16.msra.mxu0 %v773
        %796 = vmatprep.subr.bf16.mxu0 0
        %797 = vmatpush1.bf16.msra.mxu0 %v774
        %798 = vmatprep.subr.bf16.mxu0 0
        %799 = vmatpush1.bf16.msra.mxu0 %v775
        %800 = vmatprep.subr.bf16.mxu0 0
        %801 = vmatpush1.bf16.msra.mxu0 0
        %802 = vmatprep.subr.bf16.mxu0 0
        %803 = vmatpush1.bf16.msra.mxu0 0
        %804 = vmatprep.subr.bf16.mxu0 0
        %805 = vmatpush1.bf16.msra.mxu0 0
        %806 = vmatprep.subr.bf16.mxu0 0
        %807 = vmatpush1.bf16.msra.mxu0 0
        %808 = vmatprep.subr.bf16.mxu0 0
        %809 = vmatpush1.bf16.msra.mxu0 0
        %810 = vmatprep.subr.bf16.mxu0 0
        %811 = vmatpush1.bf16.msra.mxu0 0
        %812 = vmatprep.subr.bf16.mxu0 0
        %813 = vmatpush1.bf16.msra.mxu0 0
        %814 = vmatprep.subr.bf16.mxu0 0
        %815 = vmatpush1.bf16.msra.mxu0 0
        %816 = vmatprep.mubr.bf16.mxu0 0
        %817 = vmatmul.mubr.bf16.gmra.mrb[0].mxu0 %v706
        %v818 = vpop.f32.mrb[0].mxu0
        %v819 = vadd.f32 %v734, %v818
        %v820 = vpop.f32.mrb[0].mxu0
        %v821 = vpop.f32.mrb[0].mxu0
        %v822 = vadd.f32 %v734, %v821
        %v823 = vpop.f32.mrb[0].mxu0
        %824 = vmatprep.mubr.bf16.mxu0 0
        %825 = vmatmul.mubr.bf16.gmra.mrb[0].mxu0 %v707
        %v826 = vpop.f32.mrb[0].mxu0
        %v827 = vadd.f32 %v734, %v826
        %v828 = vpop.f32.mrb[0].mxu0
        %v829 = vpop.f32.mrb[0].mxu0
        %v830 = vadd.f32 %v734, %v829
        %v831 = vpop.f32.mrb[0].mxu0
        %832 = vmatprep.mubr.bf16.mxu0 0
        %833 = vmatmul.mubr.bf16.gmra.mrb[0].mxu0 %v708
        %v834 = vpop.f32.mrb[0].mxu0
        %v835 = vadd.f32 %v734, %v834
        %v836 = vpop.f32.mrb[0].mxu0
        %v837 = vpop.f32.mrb[0].mxu0
        %v838 = vadd.f32 %v734, %v837
        %v839 = vpop.f32.mrb[0].mxu0
        %840 = vmatprep.mubr.bf16.mxu0 0
        %841 = vmatmul.mubr.bf16.gmra.mrb[0].mxu0 %v709
        %v842 = vpop.f32.mrb[0].mxu0
        %v843 = vadd.f32 %v734, %v842
        %v844 = vpop.f32.mrb[0].mxu0
        %v845 = vpop.f32.mrb[0].mxu0
        %v846 = vadd.f32 %v734, %v845
        %v847 = vpop.f32.mrb[0].mxu0
        %848 = vmatprep.mubr.bf16.mxu0 0
        %849 = vmatmul.mubr.bf16.gmra.mrb[0].mxu0 %v710
        %v850 = vpop.f32.mrb[0].mxu0
        %v851 = vadd.f32 %v734, %v850
        %v852 = vpop.f32.mrb[0].mxu0
        %v853 = vpop.f32.mrb[0].mxu0
        %v854 = vadd.f32 %v734, %v853
        %v855 = vpop.f32.mrb[0].mxu0
        %856 = vmatprep.mubr.bf16.mxu0 0
        %857 = vmatmul.mubr.bf16.gmra.mrb[0].mxu0 %v711
        %v858 = vpop.f32.mrb[0].mxu0
        %v859 = vadd.f32 %v734, %v858
        %v860 = vpop.f32.mrb[0].mxu0
        %v861 = vpop.f32.mrb[0].mxu0
        %v862 = vadd.f32 %v734, %v861
        %v863 = vpop.f32.mrb[0].mxu0
        %864 = vmatprep.mubr.bf16.mxu0 0
        %865 = vmatmul.mubr.bf16.gmra.mrb[0].mxu0 %v712
        %v866 = vpop.f32.mrb[0].mxu0
        %v867 = vadd.f32 %v734, %v866
        %v868 = vpop.f32.mrb[0].mxu0
        %v869 = vpop.f32.mrb[0].mxu0
        %v870 = vpop.f32.mrb[0].mxu0
        %871 = vdwg.mxu0
        %v872 = vmax.f32 %v819, 0.0
        %v873 = vmax.f32 %v822, 0.0
        %v874 = vmax.f32 %v827, 0.0
        %v875 = vmax.f32 %v830, 0.0
        %v876 = vmax.f32 %v835, 0.0
        %v877 = vmax.f32 %v838, 0.0
        %v878 = vmax.f32 %v843, 0.0
        %v879 = vmax.f32 %v846, 0.0
        %v880 = vmax.f32 %v851, 0.0
        %v881 = vmax.f32 %v854, 0.0
        %v882 = vmax.f32 %v859, 0.0
        %v883 = vmax.f32 %v862, 0.0
        %v884 = vmax.f32 %v867, 0.0
        %v885 = vpack.c.bf16 %v873, %v872
        %v886 = vpack.c.bf16 %v875, %v874
        %v887 = vpack.c.bf16 %v877, %v876
        %v888 = vpack.c.bf16 %v879, %v878
        %v889 = vpack.c.bf16 %v881, %v880
        %v890 = vpack.c.bf16 %v883, %v882
        %v891 = vpack.c.bf16 %v884, %v884
        %v892 = vld [vmem:[%s7] sm:$0xf]
        %v893 = vld [vmem:[%s7 + $0x4] sm:$0xf]
        %v894 = vld [vmem:[%s7 + $0x8] sm:$0xf]
        %v895 = vld [vmem:[%s7 + $0xc] sm:$0xf]
        %v896 = vld [vmem:[%s7 + $0x10] sm:$0xf]
        %v897 = vld [vmem:[%s7 + $0x14] sm:$0xf]
        %v898 = vld [vmem:[%s7 + $0x18] sm:$0xf]
        %v899 = vld [vmem:[%s7 + $0x1c] sm:$0xf]
        %v900 = vld [vmem:[%s8] sm:$0x1]
        %v902 = vlaneseq
        %v903 = vshrl.u32 %v902, 7
        %v904 = vsub.s32 0, %v903
        %v905 = vrot.slane %v900, %v904
        %v915 = vunpack.c.l.b16 %v892
        %v916 = vunpack.c.l.b16 %v893
        %v917 = vunpack.c.l.b16 %v894
        %v918 = vunpack.c.l.b16 %v895
        %v919 = vunpack.c.l.b16 %v896
        %v920 = vunpack.c.l.b16 %v897
        %v921 = vunpack.c.l.b16 %v898
        %v922 = vunpack.c.l.b16 %v899
        %v923 = vpack.c.b16 %v916, %v915
        %v924 = vpack.c.b16 %v918, %v917
        %v925 = vpack.c.b16 %v920, %v919
        %v926 = vpack.c.b16 %v922, %v921
        %vm931 = vcmask 523264
        %v933 = vsel %vm931, %v885, 0
        %v936 = vsel %vm931, %v886, 0
        %v939 = vsel %vm931, %v887, 0
        %v942 = vsel %vm931, %v888, 0
        %v945 = vsel %vm931, %v889, 0
        %v948 = vsel %vm931, %v890, 0
        %v951 = vsel %vm931, %v891, 0
        %953 = vmatprep.subr.bf16.mxu0 0
        %954 = vmatpush1.bf16.msra.mxu0 %v923
        %955 = vmatprep.subr.bf16.mxu0 0
        %956 = vmatpush1.bf16.msra.mxu0 %v924
        %957 = vmatprep.subr.bf16.mxu0 0
        %958 = vmatpush1.bf16.msra.mxu0 %v925
        %959 = vmatprep.subr.bf16.mxu0 0
        %960 = vmatpush1.bf16.msra.mxu0 %v926
        %961 = vmatprep.subr.bf16.mxu0 0
        %962 = vmatpush1.bf16.msra.mxu0 0
        %963 = vmatprep.subr.bf16.mxu0 0
        %964 = vmatpush1.bf16.msra.mxu0 0
        %965 = vmatprep.subr.bf16.mxu0 0
        %966 = vmatpush1.bf16.msra.mxu0 0
        %967 = vmatprep.subr.bf16.mxu0 0
        %968 = vmatpush1.bf16.msra.mxu0 0
        %969 = vmatprep.subr.bf16.mxu0 0
        %970 = vmatpush1.bf16.msra.mxu0 0
        %971 = vmatprep.subr.bf16.mxu0 0
        %972 = vmatpush1.bf16.msra.mxu0 0
        %973 = vmatprep.subr.bf16.mxu0 0
        %974 = vmatpush1.bf16.msra.mxu0 0
        %975 = vmatprep.subr.bf16.mxu0 0
        %976 = vmatpush1.bf16.msra.mxu0 0
        %977 = vmatprep.subr.bf16.mxu0 0
        %978 = vmatpush1.bf16.msra.mxu0 0
        %979 = vmatprep.subr.bf16.mxu0 0
        %980 = vmatpush1.bf16.msra.mxu0 0
        %981 = vmatprep.subr.bf16.mxu0 0
        %982 = vmatpush1.bf16.msra.mxu0 0
        %983 = vmatprep.subr.bf16.mxu0 0
        %984 = vmatpush1.bf16.msra.mxu0 0
        %985 = vmatprep.mubr.bf16.mxu0 0
        %986 = vmatmul.mubr.bf16.gmra.mrb[0].mxu0 %v933
        %v987 = vpop.f32.mrb[0].mxu0
        %v988 = vadd.f32 %v905, %v987
        %v989 = vpop.f32.mrb[0].mxu0
        %v990 = vpop.f32.mrb[0].mxu0
        %v991 = vadd.f32 %v905, %v990
        %v992 = vpop.f32.mrb[0].mxu0
        %993 = vmatprep.mubr.bf16.mxu0 0
        %994 = vmatmul.mubr.bf16.gmra.mrb[0].mxu0 %v936
        %v995 = vpop.f32.mrb[0].mxu0
        %v996 = vadd.f32 %v905, %v995
        %v997 = vpop.f32.mrb[0].mxu0
        %v998 = vpop.f32.mrb[0].mxu0
        %v999 = vadd.f32 %v905, %v998
        %v1000 = vpop.f32.mrb[0].mxu0
        %1001 = vmatprep.mubr.bf16.mxu0 0
        %1002 = vmatmul.mubr.bf16.gmra.mrb[0].mxu0 %v939
        %v1003 = vpop.f32.mrb[0].mxu0
        %v1004 = vadd.f32 %v905, %v1003
        %v1005 = vpop.f32.mrb[0].mxu0
        %v1006 = vpop.f32.mrb[0].mxu0
        %v1007 = vadd.f32 %v905, %v1006
        %v1008 = vpop.f32.mrb[0].mxu0
        %1009 = vmatprep.mubr.bf16.mxu0 0
        %1010 = vmatmul.mubr.bf16.gmra.mrb[0].mxu0 %v942
        %v1011 = vpop.f32.mrb[0].mxu0
        %v1012 = vadd.f32 %v905, %v1011
        %v1013 = vpop.f32.mrb[0].mxu0
        %v1014 = vpop.f32.mrb[0].mxu0
        %v1015 = vadd.f32 %v905, %v1014
        %v1016 = vpop.f32.mrb[0].mxu0
        %1017 = vmatprep.mubr.bf16.mxu0 0
        %1018 = vmatmul.mubr.bf16.gmra.mrb[0].mxu0 %v945
        %v1019 = vpop.f32.mrb[0].mxu0
        %v1020 = vadd.f32 %v905, %v1019
        %v1021 = vpop.f32.mrb[0].mxu0
        %v1022 = vpop.f32.mrb[0].mxu0
        %v1023 = vadd.f32 %v905, %v1022
        %v1024 = vpop.f32.mrb[0].mxu0
        %1025 = vmatprep.mubr.bf16.mxu0 0
        %1026 = vmatmul.mubr.bf16.gmra.mrb[0].mxu0 %v948
        %v1027 = vpop.f32.mrb[0].mxu0
        %v1028 = vadd.f32 %v905, %v1027
        %v1029 = vpop.f32.mrb[0].mxu0
        %v1030 = vpop.f32.mrb[0].mxu0
        %v1031 = vadd.f32 %v905, %v1030
        %v1032 = vpop.f32.mrb[0].mxu0
        %1033 = vmatprep.mubr.bf16.mxu0 0
        %1034 = vmatmul.mubr.bf16.gmra.mrb[0].mxu0 %v951
        %v1035 = vpop.f32.mrb[0].mxu0
        %v1036 = vadd.f32 %v905, %v1035
        %v1037 = vpop.f32.mrb[0].mxu0
        %v1038 = vpop.f32.mrb[0].mxu0
        %v1039 = vpop.f32.mrb[0].mxu0
        %1040 = vdwg.mxu0
        %1041 = vst [vmem:[%s326] sm:$0xff] %v988
        %1042 = vst [vmem:[%s326 + $0x8] sm:$0xff] %v991
        %1043 = vst [vmem:[%s326 + $0x10] sm:$0xff] %v996
        %1044 = vst [vmem:[%s326 + $0x18] sm:$0xff] %v999
        %1045 = vst [vmem:[%s326 + $0x20] sm:$0xff] %v1004
        %1046 = vst [vmem:[%s326 + $0x28] sm:$0xff] %v1007
        %1047 = vst [vmem:[%s326 + $0x30] sm:$0xff] %v1012
        %1048 = vst [vmem:[%s326 + $0x38] sm:$0xff] %v1015
        %1049 = vst [vmem:[%s326 + $0x40] sm:$0xff] %v1020
        %1050 = vst [vmem:[%s326 + $0x48] sm:$0xff] %v1023
        %1051 = vst [vmem:[%s326 + $0x50] sm:$0xff] %v1028
        %1052 = vst [vmem:[%s326 + $0x58] sm:$0xff] %v1031
        %1053 = vst [vmem:[%s326 + $0x60] sm:$0xff] %v1036
        %s1054 = sand.u32 %s225, 1
        %s1055 = scalar_lea.sflag [#allocation3], %s1054
        %s1056 = sand.u32 %s225, 1
        %s1057 = smul.addr %s1056, 104
        %s1058 = scalar_lea.vmem [#allocation2], %s1057
        // Predicated region
        $region57: #{tpu_custom_call.1} parent=55 // pred_check
          %p1059 = pneg %p235
        $region58: #{tpu_custom_call.1} parent=55 // pred_check_branch
          %1061 = sbr.rel (%p1059) target = $region60
        $region59: #{tpu_custom_call.1} parent=55 // pred_region
          %s1062 = smul.u32 13, %s23
          %s1064 = ssub.s32 1664, 1664
          %1065 = vsyncadd %s1055, %s1064
          %s1066 = smul.addr %s1062, 128
          %s1067 = scalar_lea.hbm %s9, %s1066
          %s1068 = sshll.u32 %s1058, 4
          %s1069 = int_to_ptr.vmem [resolvable:$true] %s1068
          %1074 = dma.vmem_to_hbm [thread:$0]  %s1069, 1664, %s1067, %s1055, 128, 128, 8
        $region60: #{tpu_custom_call.1} parent=55 // pred_fallthru
          _
      $region56: #{tpu_custom_call.1} parent=5 // pred_fallthru
        _
      %p1075 = scmp.le.s32.totalorder 2, %s18
      // Predicated region
      $region61: #{tpu_custom_call.1} parent=5 // pred_check
        %p1076 = pneg %p1075
      $region62: #{tpu_custom_call.1} parent=5 // pred_check_branch
        %1078 = sbr.rel (%p1076) target = $region64
      $region63: #{tpu_custom_call.1} parent=5 // pred_region
        %s1079 = ssub.s32 %s18, 2
        // Predicated region
        $region65: #{tpu_custom_call.1} parent=63 // pred_check
          %p1080 = pneg %p241
        $region66: #{tpu_custom_call.1} parent=63 // pred_check_branch
          %1082 = sbr.rel (%p1080) target = $region68
        $region67: #{tpu_custom_call.1} parent=63 // pred_region
          %s1083 = sand.u32 %s226, 1
          %s1084 = scalar_lea.sflag [#allocation3], %s1083
          %s1085 = sand.u32 %s226, 1
          %s1086 = smul.addr %s1085, 104
          %s1087 = scalar_lea.vmem [#allocation2], %s1086
          %1088 = dma.done %s1084, 1664
        $region68: #{tpu_custom_call.1} parent=63 // pred_fallthru
          _
      $region64: #{tpu_custom_call.1} parent=5 // pred_fallthru
        _
    $region6: #{tpu_custom_call.1} parent=1 // loop_footer
      %s22 = sadd.s32 1, %s18
    $region7: #{tpu_custom_call.1} parent=1 // loop_footer_branch
      %17 = sbr.rel target = $region3
    $region8: #{tpu_custom_call.1} parent=1 // loop_exit
      _
    %1089 = vsyncpa [#allocation3], 1
    %s1090 = scalar_lea.sflag [#allocation3], 1
    %1091 = vsyncpa %s1090, 1

</llo_original>
